<compile_context>
chip_gen: v5e
topology: v5e:2x2
jax: 0.10.0
libtpu: 0.0.40
codegen_flags: <defaults>
</compile_context>

<pallas_src>
import jax
import jax.numpy as jnp
from jax.experimental import pallas as pl
from jax.experimental.pallas import tpu as pltpu


def _dueling_kernel(x_ref, w1_ref, b1_ref, w2_ref, b2_ref, q_ref):
    """One batch tile: q = relu(x @ W1 + b1) @ W2' + b2' (dueling pre-folded).

    x_ref : (TB, in_dim)   f32/bf16 (cast to bf16 in-VMEM before the dot)
    w1_ref: (in_dim, H2p)  bf16   [w1_adv | w1_val | 0-pad]
    b1_ref: (1, H2p)       f32
    w2_ref: (H2p, Ap)      f32    dueling combine folded in (see packing)
    b2_ref: (1, Ap)        f32
    q_ref : (TB, Ap)       bf16   cols [0, A) hold q; padded cols are exact 0
    """
    x = x_ref[...].astype(w1_ref.dtype)
    h = jnp.dot(x, w1_ref[...], preferred_element_type=jnp.float32)
    h = jnp.maximum(h + b1_ref[...], 0.0)
    q = jnp.dot(h, w2_ref[...], preferred_element_type=jnp.float32) + b2_ref[...]
    q_ref[...] = q.astype(q_ref.dtype)


def pack_dueling_params(params, compute_dtype=jnp.bfloat16):
    """Pack/fuse the dueling head weights ONCE (hoisted out of the call path)."""
    in_dim, hidden = params["w1a"].shape
    n_actions = params["w2a"].shape[1]
    h2 = 2 * hidden
    h2_pad = 128 * pl.cdiv(h2, 128)          # lane-dense hidden width
    a_pad = 128 * pl.cdiv(n_actions, 128)    # lane-dense output width

    # Layer 1: [w1_adv | w1_val | 0] -> one MXU pass yields both hidden branches.
    w1 = jnp.zeros((in_dim, h2_pad), jnp.float32)
    w1 = w1.at[:, :hidden].set(params["w1a"])
    w1 = w1.at[:, hidden:h2].set(params["w1v"])
    b1 = jnp.zeros((1, h2_pad), jnp.float32)
    b1 = b1.at[:, :hidden].set(params["b1a"])
    b1 = b1.at[:, hidden:h2].set(params["b1v"])

    # Layer 2 with the dueling combine folded in (all algebra in f32):
    #   q_j = hv @ w2v + b2v + ha @ (w2a[:, j] - mean_k w2a[:, k])
    #         + (b2a_j - mean(b2a))
    w2a_centered = params["w2a"] - jnp.mean(params["w2a"], axis=1, keepdims=True)
    w2 = jnp.zeros((h2_pad, a_pad), jnp.float32)
    w2 = w2.at[:hidden, :n_actions].set(w2a_centered)
    w2 = w2.at[hidden:h2, :n_actions].set(
        jnp.broadcast_to(params["w2v"], (hidden, n_actions)))
    b2 = jnp.zeros((1, a_pad), jnp.float32)
    b2 = b2.at[:, :n_actions].set(
        params["b2a"] - jnp.mean(params["b2a"]) + params["b2v"][0, 0])

    return {
        "w1": w1.astype(compute_dtype),  # bf16 layer-1 operand (f32 accumulation)
        "b1": b1,                        # f32 bias / VPU math (v5e has no bf16 VPU)
        "w2": w2,                        # f32 layer-2: tiny matmul, keep precision
        "b2": b2,
        "n_actions": n_actions,
    }


def _choose_batch_tile(batch, in_dim, vmem_budget_bytes=8 * 1024 * 1024):
    """Fixed large tiles, but keep >=2 grid steps (v7x megacore / pipelining)."""
    if batch <= 8:
        return batch  # full-array block (legal: equals the array dim)
    for tb in (512, 256, 128, 64, 32, 16, 8):
        # 2x double-buffered f32 x tiles must stay within a conservative budget.
        if 2 * tb <= batch and 2 * tb * in_dim * 4 <= vmem_budget_bytes:
            return tb
    return 8


def dueling_forward(x, packed):
    """Fused dueling head forward.  `packed` comes from pack_dueling_params()."""
    batch, in_dim = x.shape
    w1, b1, w2, b2 = packed["w1"], packed["b1"], packed["w2"], packed["b2"]
    n_actions = packed["n_actions"]
    h2_pad = w1.shape[1]
    a_pad = w2.shape[1]

    tb = _choose_batch_tile(batch, in_dim)
    grid = (pl.cdiv(batch, tb),)

    q_pad = pl.pallas_call(
        _dueling_kernel,
        out_shape=jax.ShapeDtypeStruct((batch, a_pad), jnp.bfloat16),
        grid=grid,
        in_specs=[
            pl.BlockSpec((tb, in_dim), lambda i: (i, 0)),        # x: tiled over batch
            pl.BlockSpec((in_dim, h2_pad), lambda i: (0, 0)),    # fused W1 (resident)
            pl.BlockSpec((1, h2_pad), lambda i: (0, 0)),         # fused b1 (resident)
            pl.BlockSpec((h2_pad, a_pad), lambda i: (0, 0)),     # folded W2 (resident)
            pl.BlockSpec((1, a_pad), lambda i: (0, 0)),          # folded b2 (resident)
        ],
        out_specs=pl.BlockSpec((tb, a_pad), lambda i: (i, 0)),
        compiler_params=pltpu.CompilerParams(
            dimension_semantics=("parallel",),      # batch tiles shard across TCs
            vmem_limit_bytes=32 * 1024 * 1024,      # above v5e's 16 MiB default
        ),
    )(x, w1, b1, w2, b2)

    # Padded action lanes are exact zeros; slice off the lane padding here.
    # (A downstream argmax could consume q_pad directly with an action mask.)
    return q_pad[:, :n_actions]


def init_params(key, in_dim, hidden, n_actions):
    """Deterministic synthetic parameters (Linear stacks: in -> hidden -> out)."""
    ks = jax.random.split(key, 8)
    s1 = 1.0 / jnp.sqrt(jnp.float32(in_dim))
    s2 = 1.0 / jnp.sqrt(jnp.float32(hidden))
    return {
        # advantage stack: in_dim -> hidden -> n_actions
        "w1a": jax.random.normal(ks[0], (in_dim, hidden), jnp.float32) * s1,
        "b1a": jax.random.normal(ks[1], (1, hidden), jnp.float32) * 0.01,
        "w2a": jax.random.normal(ks[2], (hidden, n_actions), jnp.float32) * s2,
        "b2a": jax.random.normal(ks[3], (1, n_actions), jnp.float32) * 0.01,
        # value stack: in_dim -> hidden -> 1
        "w1v": jax.random.normal(ks[4], (in_dim, hidden), jnp.float32) * s1,
        "b1v": jax.random.normal(ks[5], (1, hidden), jnp.float32) * 0.01,
        "w2v": jax.random.normal(ks[6], (hidden, 1), jnp.float32) * s2,
        "b2v": jax.random.normal(ks[7], (1, 1), jnp.float32) * 0.01,
    }


def dueling_reference(x, p):
    """Pure-JAX f32 reference mirroring the PyTorch forward (identify_mean=True)."""
    ha = jnp.maximum(x @ p["w1a"] + p["b1a"], 0.0)
    adv = ha @ p["w2a"] + p["b2a"]
    hv = jnp.maximum(x @ p["w1v"] + p["b1v"], 0.0)
    val = hv @ p["w2v"] + p["b2v"]
    return val + adv - adv.mean(axis=-1, keepdims=True)


if __name__ == "__main__":
    B, IN_DIM, HIDDEN, N_ACTIONS = 8, 32, 32, 8

    key = jax.random.PRNGKey(0)
    kx, kp = jax.random.split(key)
    x = jax.random.normal(kx, (B, IN_DIM), jnp.float32)
    params = init_params(kp, IN_DIM, HIDDEN, N_ACTIONS)

    # Pack/fuse the weights once (out of the per-call path), then run forward.
    packed = pack_dueling_params(params)
    q = dueling_forward(x, packed)
    q = jax.block_until_ready(q)

    q_ref = dueling_reference(x, params)
    assert q.shape == (B, N_ACTIONS)
    # bf16 layer-1 operands and bf16 output (f32 accumulation throughout) ->
    # compare against the f32 reference at bf16-appropriate tolerance.
    err = float(jnp.max(jnp.abs(q.astype(jnp.float32) - q_ref)))
    assert jnp.allclose(q.astype(jnp.float32), q_ref, atol=5e-2, rtol=5e-2), \
        f"max abs err {err}"

    print("KERNEL_OK")
</pallas_src>

<mosaic_0001>
module attributes {stable_mosaic.version = 11 : i64} {
  func.func @_dueling_kernel(%arg0: i32, %arg1: memref<8x32xf32, #tpu.memory_space<vmem>>, %arg2: memref<32x128xbf16, #tpu.memory_space<vmem>>, %arg3: memref<1x128xf32, #tpu.memory_space<vmem>>, %arg4: memref<128x128xf32, #tpu.memory_space<vmem>>, %arg5: memref<1x128xf32, #tpu.memory_space<vmem>>, %arg6: memref<8x128xbf16, #tpu.memory_space<vmem>>) attributes {dimension_semantics = [#tpu.dimension_semantics<parallel>], iteration_bounds = array<i64: 1>, scalar_prefetch = 0 : i64, scratch_operands = 0 : i64, tpu.core_type = #tpu.core_type<tc>, window_params = [{transform_indices = @transform_0, window_bounds = array<i64: 8, 32>}, {pipeline_mode = #tpu.pipeline_mode<synchronous>, transform_indices = @transform_1, window_bounds = array<i64: 32, 128>}, {pipeline_mode = #tpu.pipeline_mode<synchronous>, transform_indices = @transform_2, window_bounds = array<i64: 1, 128>}, {pipeline_mode = #tpu.pipeline_mode<synchronous>, transform_indices = @transform_3, window_bounds = array<i64: 128, 128>}, {pipeline_mode = #tpu.pipeline_mode<synchronous>, transform_indices = @transform_4, window_bounds = array<i64: 1, 128>}, {transform_indices = @transform_5, window_bounds = array<i64: 8, 128>}]} {
    %c0 = arith.constant 0 : index
    %c0_0 = arith.constant 0 : index
    %0 = vector.load %arg1[%c0, %c0_0] : memref<8x32xf32, #tpu.memory_space<vmem>>, vector<8x32xf32>
    %1 = arith.truncf %0 : vector<8x32xf32> to vector<8x32xbf16>
    %c0_1 = arith.constant 0 : index
    %c0_2 = arith.constant 0 : index
    %2 = vector.load %arg2[%c0_1, %c0_2] : memref<32x128xbf16, #tpu.memory_space<vmem>>, vector<32x128xbf16>
    %cst = arith.constant dense<0.000000e+00> : vector<8x128xf32>
    %3 = tpu.matmul %1, %2, %cst {dimension_numbers = #tpu.dot_dimension_numbers<[1], [0], [0], [1], [0, 0, 1, 1], [], []>} : vector<8x32xbf16>, vector<32x128xbf16>, vector<8x128xf32> -> vector<8x128xf32>
    %c0_3 = arith.constant 0 : index
    %c0_4 = arith.constant 0 : index
    %4 = vector.load %arg3[%c0_3, %c0_4] : memref<1x128xf32, #tpu.memory_space<vmem>>, vector<1x128xf32>
    %5 = vector.broadcast %4 : vector<1x128xf32> to vector<8x128xf32>
    %6 = arith.addf %3, %5 : vector<8x128xf32>
    %cst_5 = arith.constant 0.000000e+00 : f32
    %7 = vector.broadcast %cst_5 : f32 to vector<8x128xf32>
    %8 = arith.maximumf %6, %7 : vector<8x128xf32>
    %c0_6 = arith.constant 0 : index
    %c0_7 = arith.constant 0 : index
    %9 = vector.load %arg4[%c0_6, %c0_7] : memref<128x128xf32, #tpu.memory_space<vmem>>, vector<128x128xf32>
    %cst_8 = arith.constant dense<0.000000e+00> : vector<8x128xf32>
    %10 = tpu.matmul %8, %9, %cst_8 {dimension_numbers = #tpu.dot_dimension_numbers<[1], [0], [0], [1], [0, 0, 1, 1], [], []>} : vector<8x128xf32>, vector<128x128xf32>, vector<8x128xf32> -> vector<8x128xf32>
    %c0_9 = arith.constant 0 : index
    %c0_10 = arith.constant 0 : index
    %11 = vector.load %arg5[%c0_9, %c0_10] : memref<1x128xf32, #tpu.memory_space<vmem>>, vector<1x128xf32>
    %12 = vector.broadcast %11 : vector<1x128xf32> to vector<8x128xf32>
    %13 = arith.addf %10, %12 : vector<8x128xf32>
    %14 = arith.truncf %13 : vector<8x128xf32> to vector<8x128xbf16>
    %c0_11 = arith.constant 0 : index
    %c0_12 = arith.constant 0 : index
    %15 = vector.load %arg6[%c0_11, %c0_12] : memref<8x128xbf16, #tpu.memory_space<vmem>>, vector<8x128xbf16>
    tpu.vector_store %arg6[%c0_11, %c0_12], %14 {strides = array<i32>} : memref<8x128xbf16, #tpu.memory_space<vmem>>, vector<8x128xbf16>,
    return
  }
  func.func @transform_0(%arg0: i32) -> (i32, i32) {
    %c0_i32 = arith.constant 0 : i32
    %c0_i32_0 = arith.constant 0 : i32
    return %arg0, %c0_i32 : i32, i32
  }
  func.func @transform_1(%arg0: i32) -> (i32, i32) {
    %c0_i32 = arith.constant 0 : i32
    %c0_i32_0 = arith.constant 0 : i32
    %c0_i32_1 = arith.constant 0 : i32
    return %c0_i32, %c0_i32_0 : i32, i32
  }
  func.func @transform_2(%arg0: i32) -> (i32, i32) {
    %c0_i32 = arith.constant 0 : i32
    %c0_i32_0 = arith.constant 0 : i32
    %c0_i32_1 = arith.constant 0 : i32
    return %c0_i32, %c0_i32_0 : i32, i32
  }
  func.func @transform_3(%arg0: i32) -> (i32, i32) {
    %c0_i32 = arith.constant 0 : i32
    %c0_i32_0 = arith.constant 0 : i32
    %c0_i32_1 = arith.constant 0 : i32
    return %c0_i32, %c0_i32_0 : i32, i32
  }
  func.func @transform_4(%arg0: i32) -> (i32, i32) {
    %c0_i32 = arith.constant 0 : i32
    %c0_i32_0 = arith.constant 0 : i32
    %c0_i32_1 = arith.constant 0 : i32
    return %c0_i32, %c0_i32_0 : i32, i32
  }
  func.func @transform_5(%arg0: i32) -> (i32, i32) {
    %c0_i32 = arith.constant 0 : i32
    %c0_i32_0 = arith.constant 0 : i32
    return %arg0, %c0_i32 : i32, i32
  }
}

</mosaic_0001>

<llo_original>
// kernel: tpu_custom_call.1
$region0: #{tpu_custom_call.1}
  #allocation0 [shape = 'u32[]', space=smem, size = 0x4, offset = 0x4, fixed_abs, tag = 'smem constant byte address 0x4 - core index']
  #allocation1 [shape = 'u32[72,128]{1,0:T(1,128)}', space=vmem, size = 0x9000, scoped, tag = 'internal scratch']
  %s0 = inlined_call_operand.hbm [shape: f32[8,32], index: 0, kind: input, shape index: {}]
  %s1 = inlined_call_operand.hbm [shape: bf16[32,128], index: 1, kind: input, shape index: {}]
  %s2 = inlined_call_operand.vmem [shape: f32[1,128], index: 2, kind: input, shape index: {}]
  %s3 = inlined_call_operand.hbm [shape: f32[128,128], index: 3, kind: input, shape index: {}]
  %s4 = inlined_call_operand.vmem [shape: f32[1,128], index: 4, kind: input, shape index: {}]
  %s5 = inlined_call_operand.hbm [shape: bf16[8,128], index: 5, kind: output, shape index: {}]
  %s6 = sld [smem:[#allocation0]]
  $region42: #{tpu_custom_call.1} parent=0
    _
  %s8 = ssub.s32 1, %s6
  %s9 = scalar_select 0, %s8, %s6
  $region1: #{tpu_custom_call.1} parent=0
    #allocation2 [shape = 'u8[4096]{0}', space=vmem, size = 0x1000, scoped, tag = 'input window, operand 0, single buffered']
    #allocation3 [shape = 's32[1]{0}', space=sflag, size = 0x4, scoped, tag = 'scoped memory for tpu_custom_call.1']
    #allocation4 [shape = 's32[1]{0}', space=sflag, size = 0x4, scoped, tag = 'scoped memory for tpu_custom_call.1']
    #allocation5 [shape = 'u8[8192]{0}', space=vmem, size = 0x2000, scoped, tag = 'input window, operand 1, single buffered']
    #allocation6 [shape = 's32[1]{0}', space=sflag, size = 0x4, scoped, tag = 'scoped memory for tpu_custom_call.1']
    #allocation7 [shape = 'u8[65536]{0}', space=vmem, size = 0x10000, scoped, tag = 'input window, operand 3, single buffered']
    #allocation8 [shape = 'u8[2048]{0}', space=vmem, size = 0x800, scoped, tag = 'output window, operand 0, single buffered']
    %10 = vsyncpa [#allocation3], 0
    %11 = vsyncpa [#allocation6], 0
    %12 = vsyncpa [#allocation4], 0
    // Predicated region
    $region2: #{tpu_custom_call.1} parent=1 // pred_check
      _
    $region3: #{tpu_custom_call.1} parent=1 // pred_check_branch
      %14 = sbr.rel (0) target = $region5
    $region4: #{tpu_custom_call.1} parent=1 // pred_region
      %16 = vsyncadd [#allocation3], 0
      %s18 = sshll.u32 %s0, 4
      %s19 = int_to_ptr.hbm [resolvable:$true] %s18
      %s20 = sshll.u32 [#allocation2], 4
      %s21 = int_to_ptr.vmem [resolvable:$true] %s20
      %23 = dma.hbm_to_vmem [thread:$0]  %s19, 128, %s21, [#allocation3]
    $region5: #{tpu_custom_call.1} parent=1 // pred_fallthru
      _
    // Predicated region
    $region6: #{tpu_custom_call.1} parent=1 // pred_check
      _
    $region7: #{tpu_custom_call.1} parent=1 // pred_check_branch
      %25 = sbr.rel (0) target = $region9
    $region8: #{tpu_custom_call.1} parent=1 // pred_region
      %27 = vsyncadd [#allocation6], 0
      %s28 = sshll.u32 %s1, 4
      %s29 = int_to_ptr.hbm [resolvable:$true] %s28
      %s30 = sshll.u32 [#allocation5], 4
      %s31 = int_to_ptr.vmem [resolvable:$true] %s30
      %36 = dma.hbm_to_vmem [thread:$0]  %s29, 256, %s31, [#allocation6], 64, 64, 4
    $region9: #{tpu_custom_call.1} parent=1 // pred_fallthru
      _
    // Predicated region
    $region10: #{tpu_custom_call.1} parent=1 // pred_check
      _
    $region11: #{tpu_custom_call.1} parent=1 // pred_check_branch
      %38 = sbr.rel (0) target = $region13
    $region12: #{tpu_custom_call.1} parent=1 // pred_region
      _
    $region13: #{tpu_custom_call.1} parent=1 // pred_fallthru
      _
    // Predicated region
    $region14: #{tpu_custom_call.1} parent=1 // pred_check
      _
    $region15: #{tpu_custom_call.1} parent=1 // pred_check_branch
      %40 = sbr.rel (0) target = $region17
    $region16: #{tpu_custom_call.1} parent=1 // pred_region
      %42 = vsyncadd [#allocation6], 0
      %s43 = sshll.u32 %s3, 4
      %s44 = int_to_ptr.hbm [resolvable:$true] %s43
      %s45 = sshll.u32 [#allocation7], 4
      %s46 = int_to_ptr.vmem [resolvable:$true] %s45
      %51 = dma.hbm_to_vmem [thread:$0]  %s44, 2048, %s46, [#allocation6], 128, 128, 8
    $region17: #{tpu_custom_call.1} parent=1 // pred_fallthru
      _
    // Predicated region
    $region18: #{tpu_custom_call.1} parent=1 // pred_check
      _
    $region19: #{tpu_custom_call.1} parent=1 // pred_check_branch
      %53 = sbr.rel (0) target = $region21
    $region20: #{tpu_custom_call.1} parent=1 // pred_region
      _
    $region21: #{tpu_custom_call.1} parent=1 // pred_fallthru
      _
    // Predicated region
    $region22: #{tpu_custom_call.1} parent=1 // pred_check
      _
    $region23: #{tpu_custom_call.1} parent=1 // pred_check_branch
      %55 = sbr.rel (0) target = $region25
    $region24: #{tpu_custom_call.1} parent=1 // pred_region
      %57 = dma.done [#allocation3], 128
    $region25: #{tpu_custom_call.1} parent=1 // pred_fallthru
      _
    // Predicated region
    $region26: #{tpu_custom_call.1} parent=1 // pred_check
      _
    $region27: #{tpu_custom_call.1} parent=1 // pred_check_branch
      %59 = sbr.rel (0) target = $region29
    $region28: #{tpu_custom_call.1} parent=1 // pred_region
      %61 = dma.done [#allocation6], 256
    $region29: #{tpu_custom_call.1} parent=1 // pred_fallthru
      _
    // Predicated region
    $region30: #{tpu_custom_call.1} parent=1 // pred_check
      _
    $region31: #{tpu_custom_call.1} parent=1 // pred_check_branch
      %63 = sbr.rel (0) target = $region33
    $region32: #{tpu_custom_call.1} parent=1 // pred_region
      %65 = dma.done [#allocation6], 2048
    $region33: #{tpu_custom_call.1} parent=1 // pred_fallthru
      _
    %v67 = vld [vmem:[#allocation2] sm:$0xff]
    %v68 = vpack.c.bf16 %v67, %v67
    %v69 = vld [vmem:[#allocation5] sm:$0xf]
    %v70 = vld [vmem:[#allocation5 + $0x4] sm:$0xf]
    %v71 = vld [vmem:[#allocation5 + $0x8] sm:$0xf]
    %v72 = vld [vmem:[#allocation5 + $0xc] sm:$0xf]
    %v73 = vld [vmem:[%s2] sm:$0x1]
    %v75 = vperm.slane %v73, 0
    %v81 = vunpack.c.l.b16 %v69
    %v82 = vunpack.c.l.b16 %v70
    %v83 = vunpack.c.l.b16 %v71
    %v84 = vunpack.c.l.b16 %v72
    %v85 = vpack.c.b16 %v82, %v81
    %v86 = vpack.c.b16 %v84, %v83
    %vm89 = vcmask 261120
    %v91 = vsel %vm89, %v68, 0
    %93 = vmatpush.bf16.msra.mxu0 0
    %94 = vmatpush.bf16.msra.mxu0 0
    %95 = vmatpush.bf16.msra.mxu0 0
    %96 = vmatpush.bf16.msra.mxu0 0
    %97 = vmatpush.bf16.msra.mxu0 0
    %98 = vmatpush.bf16.msra.mxu0 0
    %99 = vmatpush.bf16.msra.mxu0 %v86
    %100 = vmatpush.bf16.msra.mxu0 %v85
    %101 = vmatmul.bf16.gmra.mxu0 %v91
    %v102 = vpop.f32.mrf.mxu0
    %v103 = vadd.f32 %v75, %v102
    %v104 = vpop.f32.mrf.mxu0
    %105 = vdwg.mxu0
    %v106 = vmax.f32 %v103, 0.0
    %v107 = vld [vmem:[#allocation7] sm:$0xff]
    %v108 = vld [vmem:[#allocation7 + $0x8] sm:$0xff]
    %v109 = vld [vmem:[#allocation7 + $0x10] sm:$0xff]
    %v110 = vld [vmem:[#allocation7 + $0x18] sm:$0xff]
    %v111 = vld [vmem:[#allocation7 + $0x20] sm:$0xff]
    %v112 = vld [vmem:[#allocation7 + $0x28] sm:$0xff]
    %v113 = vld [vmem:[#allocation7 + $0x30] sm:$0xff]
    %v114 = vld [vmem:[#allocation7 + $0x38] sm:$0xff]
    %v115 = vld [vmem:[#allocation7 + $0x40] sm:$0xff]
    %v116 = vld [vmem:[#allocation7 + $0x48] sm:$0xff]
    %v117 = vld [vmem:[#allocation7 + $0x50] sm:$0xff]
    %v118 = vld [vmem:[#allocation7 + $0x58] sm:$0xff]
    %v119 = vld [vmem:[#allocation7 + $0x60] sm:$0xff]
    %v120 = vld [vmem:[#allocation7 + $0x68] sm:$0xff]
    %v121 = vld [vmem:[#allocation7 + $0x70] sm:$0xff]
    %v122 = vld [vmem:[#allocation7 + $0x78] sm:$0xff]
    %v123 = vld [vmem:[%s4] sm:$0x1]
    %v125 = vperm.slane %v123, 0
    %127 = vmatpush.msra.mxu0 %v122
    %128 = vmatpush.msra.mxu0 %v121
    %129 = vmatpush.msra.mxu0 %v120
    %130 = vmatpush.msra.mxu0 %v119
    %131 = vmatpush.msra.mxu0 %v118
    %132 = vmatpush.msra.mxu0 %v117
    %133 = vmatpush.msra.mxu0 %v116
    %134 = vmatpush.msra.mxu0 %v115
    %135 = vmatpush.msra.mxu0 %v114
    %136 = vmatpush.msra.mxu0 %v113
    %137 = vmatpush.msra.mxu0 %v112
    %138 = vmatpush.msra.mxu0 %v111
    %139 = vmatpush.msra.mxu0 %v110
    %140 = vmatpush.msra.mxu0 %v109
    %141 = vmatpush.msra.mxu0 %v108
    %142 = vmatpush.msra.mxu0 %v107
    %143 = vmatmul.f32.gmra.mxu0 %v106
    %v144 = vpop.f32.mrf.mxu0
    %v145 = vadd.f32 %v125, %v144
    %146 = vdwg.mxu0
    %v147 = vpack.c.bf16 %v145, %v145
    %148 = vst [vmem:[#allocation8] sm:$0xf] %v147
    // Predicated region
    $region34: #{tpu_custom_call.1} parent=1 // pred_check
      _
    $region35: #{tpu_custom_call.1} parent=1 // pred_check_branch
      %150 = sbr.rel (0) target = $region37
    $region36: #{tpu_custom_call.1} parent=1 // pred_region
      %152 = vsyncadd [#allocation4], 0
      %s154 = sshll.u32 [#allocation8], 4
      %s155 = int_to_ptr.vmem [resolvable:$true] %s154
      %s156 = sshll.u32 %s5, 4
      %s157 = int_to_ptr.hbm [resolvable:$true] %s156
      %159 = dma.vmem_to_hbm [thread:$0]  %s155, 64, %s157, [#allocation4]
    $region37: #{tpu_custom_call.1} parent=1 // pred_fallthru
      _
    // Predicated region
    $region38: #{tpu_custom_call.1} parent=1 // pred_check
      _
    $region39: #{tpu_custom_call.1} parent=1 // pred_check_branch
      %161 = sbr.rel (0) target = $region41
    $region40: #{tpu_custom_call.1} parent=1 // pred_region
      %163 = dma.done [#allocation4], 64
    $region41: #{tpu_custom_call.1} parent=1 // pred_fallthru
      _
    %164 = vsyncpa [#allocation3], 1
    %165 = vsyncpa [#allocation6], 1
    %166 = vsyncpa [#allocation4], 1

</llo_original>
